<compile_context>
chip_gen: v6e
topology: v6e:2x2x1
jax: 0.10.0
libtpu: 0.0.40
codegen_flags: <defaults>
</compile_context>

<pallas_src>
import functools

import jax
import jax.numpy as jnp
from jax.experimental import pallas as pl
from jax.experimental.pallas import tpu as pltpu


# ----------------------------- Pallas kernel -----------------------------

def _round_up(v: int, m: int) -> int:
    return (v + m - 1) // m * m


def _matmul_bias_act_kernel(x_ref, w_ref, b_ref, o_ref, acc_ref, *, apply_silu: bool):
    """Tiled fused matmul: acc += x @ w over K; on last K step add bias, (SiLU), store."""
    k = pl.program_id(2)

    @pl.when(k == 0)
    def _():
        acc_ref[...] = jnp.zeros_like(acc_ref)

    acc_ref[...] += jnp.dot(x_ref[...], w_ref[...],
                            preferred_element_type=jnp.float32)

    @pl.when(k == pl.num_programs(2) - 1)
    def _():
        acc = acc_ref[...] + b_ref[...]          # (TM, TN) + (1, TN)
        if apply_silu:
            acc = acc * jax.nn.sigmoid(acc)      # SiLU (YOLO activation)
        o_ref[...] = acc.astype(o_ref.dtype)


def fused_matmul(x, w, b, apply_silu: bool, out_dtype=jnp.float32):
    """x: (M, K), w: (K, N), b: (N,) -> (M, N) in out_dtype.

    Pads M/K/N to TPU-friendly multiples (K, N -> 128; M -> 16), feeds the MXU
    bf16 operands, accumulates in f32, and tiles the grid over (M, N, K).
    """
    M, K = x.shape
    K2, N = w.shape
    assert K == K2

    TM_MAX, TN_MAX, TK_MAX = 512, 256, 512
    M_pad = _round_up(M, 16)
    K_pad = _round_up(K, 128)
    N_pad = _round_up(N, 128)
    TM = min(TM_MAX, M_pad); M_pad = _round_up(M_pad, TM)
    TN = min(TN_MAX, N_pad); N_pad = _round_up(N_pad, TN)
    TK = min(TK_MAX, K_pad); K_pad = _round_up(K_pad, TK)

    xp = jnp.pad(x.astype(jnp.bfloat16), ((0, M_pad - M), (0, K_pad - K)))
    wp = jnp.pad(w.astype(jnp.bfloat16), ((0, K_pad - K), (0, N_pad - N)))
    bp = jnp.pad(b.reshape(1, -1).astype(jnp.float32), ((0, 0), (0, N_pad - N)))

    grid = (M_pad // TM, N_pad // TN, K_pad // TK)
    kernel = functools.partial(_matmul_bias_act_kernel, apply_silu=apply_silu)

    cost = pl.CostEstimate(
        flops=2 * M_pad * N_pad * K_pad,
        transcendentals=M_pad * N_pad if apply_silu else 0,
        bytes_accessed=(xp.size + wp.size) * 2 + bp.size * 4
                       + M_pad * N_pad * jnp.dtype(out_dtype).itemsize,
    )

    out = pl.pallas_call(
        kernel,
        out_shape=jax.ShapeDtypeStruct((M_pad, N_pad), out_dtype),
        grid_spec=pltpu.PrefetchScalarGridSpec(
            num_scalar_prefetch=0,
            grid=grid,
            in_specs=[
                pl.BlockSpec((TM, TK), lambda i, j, k: (i, k)),
                pl.BlockSpec((TK, TN), lambda i, j, k: (k, j)),
                pl.BlockSpec((1, TN), lambda i, j, k: (0, j)),
            ],
            out_specs=pl.BlockSpec((TM, TN), lambda i, j, k: (i, j)),
            scratch_shapes=[pltpu.VMEM((TM, TN), jnp.float32)],
        ),
        compiler_params=pltpu.CompilerParams(
            dimension_semantics=("parallel", "parallel", "arbitrary")),
        cost_estimate=cost,
    )(xp, wp, bp)

    return out[:M, :N]


# ----------------------------- Conv via im2col ----------------------------

def conv2d_nhwc(x, w, b, stride, pad, apply_silu=True, out_dtype=jnp.float32):
    """Conv with NHWC activations. w is PyTorch layout (Cout, Cin, kh, kw), b (Cout,)."""
    B, H, W, Cin = x.shape
    Cout, Cin2, kh, kw = w.shape
    assert Cin == Cin2
    xp = jnp.pad(x, ((0, 0), (pad, pad), (pad, pad), (0, 0)))
    Ho = (H + 2 * pad - kh) // stride + 1
    Wo = (W + 2 * pad - kw) // stride + 1

    # TODO(synk): im2col expansion still happens in JAX glue (fused under jit) rather than
    # as a 9-offset accumulation inside the kernel; acceptable at these shapes.
    cols = []
    for i in range(kh):
        for j in range(kw):
            cols.append(xp[:, i:i + stride * Ho:stride, j:j + stride * Wo:stride, :])
    patches = jnp.concatenate(cols, axis=-1).reshape(B * Ho * Wo, kh * kw * Cin)

    # match patch channel ordering (kh, kw, Cin)
    w_mat = jnp.transpose(w, (2, 3, 1, 0)).reshape(kh * kw * Cin, Cout)

    out = fused_matmul(patches, w_mat, b, apply_silu, out_dtype)
    return out.reshape(B, Ho, Wo, Cout)


# ----------------------- Synthetic YOLO inner model -----------------------

class SyntheticYoloInner:
    """Deterministic small stand-in for `model.model` (backbone + detect head)."""

    def __init__(self, in_ch: int, nc: int, key):
        self.nc = nc
        c1, c2 = 16, 32
        head_c = 4 + nc
        k = jax.random.split(key, 6)
        s = 0.05
        self.w1 = s * jax.random.normal(k[0], (c1, in_ch, 3, 3), jnp.float32)
        self.b1 = s * jax.random.normal(k[1], (c1,), jnp.float32)
        self.w2 = s * jax.random.normal(k[2], (c2, c1, 3, 3), jnp.float32)
        self.b2 = s * jax.random.normal(k[3], (c2,), jnp.float32)
        self.w3 = s * jax.random.normal(k[4], (head_c, c2, 1, 1), jnp.float32)
        self.b3 = s * jax.random.normal(k[5], (head_c,), jnp.float32)

    def __call__(self, x_nchw):
        # One layout change at the boundary; NHWC end-to-end internally.
        x = jnp.transpose(x_nchw, (0, 2, 3, 1))                       # NCHW -> NHWC
        y1 = conv2d_nhwc(x, self.w1, self.b1, stride=2, pad=1,
                         apply_silu=True, out_dtype=jnp.bfloat16)
        y2 = conv2d_nhwc(y1, self.w2, self.b2, stride=2, pad=1,
                         apply_silu=True, out_dtype=jnp.bfloat16)
        head = conv2d_nhwc(y2, self.w3, self.b3, stride=1, pad=0,
                           apply_silu=False, out_dtype=jnp.float32)
        B, Ho, Wo, Ch = head.shape
        # (B, Ho, Wo, C) -> (B, C, Ho*Wo), anchor order h*Wo + w == PyTorch NCHW reshape.
        preds = jnp.transpose(head.reshape(B, Ho * Wo, Ch), (0, 2, 1))
        return (preds, y2)                       # tuple, so the wrapper picks [0]


class _InnerHolder:
    """Mimics the ultralytics object exposing .nc and .model."""

    def __init__(self, nc, inner):
        self.nc = nc
        self.model = inner


class Model:
    """JAX/Pallas port of the PyTorch wrapper `Model`."""

    def __init__(self, model):
        self.nc = model.nc
        self.model = model.model

    def forward(self, x):
        outputs = self.model(x)
        return outputs[0] if isinstance(outputs, (tuple, list)) else outputs

    __call__ = forward


# --------------------------------- main -----------------------------------

if __name__ == "__main__":
    key = jax.random.PRNGKey(0)
    k_in, k_par = jax.random.split(key)

    B, C, H, W = 2, 4, 16, 16
    nc = 3
    x = jax.random.normal(k_in, (B, C, H, W), jnp.float32)   # NCHW input

    inner = SyntheticYoloInner(in_ch=C, nc=nc, key=k_par)
    model = Model(_InnerHolder(nc=nc, inner=inner))

    fwd = jax.jit(model.forward)          # fuse transposes/padding/im2col around the kernels
    out = jax.block_until_ready(fwd(x))

    expected_anchors = (H // 4) * (W // 4)
    assert out.shape == (B, 4 + nc, expected_anchors), out.shape
    assert jnp.all(jnp.isfinite(out))
    print("KERNEL_OK")
</pallas_src>

<mosaic_0001>
module attributes {stable_mosaic.version = 11 : i64} {
  func.func @_matmul_bias_act_kernel(%arg0: i32, %arg1: i32, %arg2: i32, %arg3: memref<128x128xbf16, #tpu.memory_space<vmem>>, %arg4: memref<128x128xbf16, #tpu.memory_space<vmem>>, %arg5: memref<1x128xf32, #tpu.memory_space<vmem>>, %arg6: memref<128x128xbf16, #tpu.memory_space<vmem>>, %arg7: memref<128x128xf32, #tpu.memory_space<vmem>>) attributes {dimension_semantics = [#tpu.dimension_semantics<parallel>, #tpu.dimension_semantics<parallel>, #tpu.dimension_semantics<arbitrary>], iteration_bounds = array<i64: 1, 1, 1>, scalar_prefetch = 0 : i64, scratch_operands = 1 : i64, tpu.core_type = #tpu.core_type<tc>, window_params = [{transform_indices = @transform_0, window_bounds = array<i64: 128, 128>}, {transform_indices = @transform_1, window_bounds = array<i64: 128, 128>}, {transform_indices = @transform_2, window_bounds = array<i64: 1, 128>}, {transform_indices = @transform_3, window_bounds = array<i64: 128, 128>}]} {
    %c0_i32 = arith.constant 0 : i32
    %0 = arith.cmpi eq, %arg2, %c0_i32 : i32
    %1 = arith.extui %0 : i1 to i32
    %c0_i32_0 = arith.constant 0 : i32
    %2 = arith.cmpi ne, %1, %c0_i32_0 : i32
    scf.if %2 {
      %cst_10 = arith.constant 0.000000e+00 : f32
      %12 = vector.broadcast %cst_10 : f32 to vector<128x128xf32>
      %c0_11 = arith.constant 0 : index
      %c0_12 = arith.constant 0 : index
      %13 = vector.load %arg7[%c0_11, %c0_12] : memref<128x128xf32, #tpu.memory_space<vmem>>, vector<128x128xf32>
      tpu.vector_store %arg7[%c0_11, %c0_12], %12 {strides = array<i32>} : memref<128x128xf32, #tpu.memory_space<vmem>>, vector<128x128xf32>,
    } else {
    }
    %c0 = arith.constant 0 : index
    %c0_1 = arith.constant 0 : index
    %3 = vector.load %arg7[%c0, %c0_1] : memref<128x128xf32, #tpu.memory_space<vmem>>, vector<128x128xf32>
    %c0_2 = arith.constant 0 : index
    %c0_3 = arith.constant 0 : index
    %4 = vector.load %arg3[%c0_2, %c0_3] : memref<128x128xbf16, #tpu.memory_space<vmem>>, vector<128x128xbf16>
    %c0_4 = arith.constant 0 : index
    %c0_5 = arith.constant 0 : index
    %5 = vector.load %arg4[%c0_4, %c0_5] : memref<128x128xbf16, #tpu.memory_space<vmem>>, vector<128x128xbf16>
    %cst = arith.constant dense<0.000000e+00> : vector<128x128xf32>
    %6 = tpu.matmul %4, %5, %cst {dimension_numbers = #tpu.dot_dimension_numbers<[1], [0], [0], [1], [0, 0, 1, 1], [], []>} : vector<128x128xbf16>, vector<128x128xbf16>, vector<128x128xf32> -> vector<128x128xf32>
    %7 = arith.addf %3, %6 : vector<128x128xf32>
    %c0_6 = arith.constant 0 : index
    %c0_7 = arith.constant 0 : index
    %8 = vector.load %arg7[%c0_6, %c0_7] : memref<128x128xf32, #tpu.memory_space<vmem>>, vector<128x128xf32>
    tpu.vector_store %arg7[%c0_6, %c0_7], %7 {strides = array<i32>} : memref<128x128xf32, #tpu.memory_space<vmem>>, vector<128x128xf32>,
    %c0_i32_8 = arith.constant 0 : i32
    %9 = arith.cmpi eq, %arg2, %c0_i32_8 : i32
    %10 = arith.extui %9 : i1 to i32
    %c0_i32_9 = arith.constant 0 : i32
    %11 = arith.cmpi ne, %10, %c0_i32_9 : i32
    scf.if %11 {
      %c0_10 = arith.constant 0 : index
      %c0_11 = arith.constant 0 : index
      %12 = vector.load %arg7[%c0_10, %c0_11] : memref<128x128xf32, #tpu.memory_space<vmem>>, vector<128x128xf32>
      %c0_12 = arith.constant 0 : index
      %c0_13 = arith.constant 0 : index
      %13 = vector.load %arg5[%c0_12, %c0_13] : memref<1x128xf32, #tpu.memory_space<vmem>>, vector<1x128xf32>
      %14 = vector.broadcast %13 : vector<1x128xf32> to vector<128x128xf32>
      %15 = arith.addf %12, %14 : vector<128x128xf32>
      %16 = arith.negf %15 : vector<128x128xf32>
      %17 = math.exp %16 : vector<128x128xf32>
      %cst_14 = arith.constant 1.000000e+00 : f32
      %18 = vector.broadcast %cst_14 : f32 to vector<128x128xf32>
      %19 = arith.addf %18, %17 : vector<128x128xf32>
      %20 = arith.divf %18, %19 : vector<128x128xf32>
      %21 = arith.mulf %15, %20 : vector<128x128xf32>
      %22 = arith.truncf %21 : vector<128x128xf32> to vector<128x128xbf16>
      %c0_15 = arith.constant 0 : index
      %c0_16 = arith.constant 0 : index
      %23 = vector.load %arg6[%c0_15, %c0_16] : memref<128x128xbf16, #tpu.memory_space<vmem>>, vector<128x128xbf16>
      tpu.vector_store %arg6[%c0_15, %c0_16], %22 {strides = array<i32>} : memref<128x128xbf16, #tpu.memory_space<vmem>>, vector<128x128xbf16>,
    } else {
    }
    return
  }
  func.func @transform_0(%arg0: i32, %arg1: i32, %arg2: i32) -> (i32, i32) {
    %c0_i32 = arith.constant 0 : i32
    return %arg0, %arg2 : i32, i32
  }
  func.func @transform_1(%arg0: i32, %arg1: i32, %arg2: i32) -> (i32, i32) {
    %c0_i32 = arith.constant 0 : i32
    return %arg2, %arg1 : i32, i32
  }
  func.func @transform_2(%arg0: i32, %arg1: i32, %arg2: i32) -> (i32, i32) {
    %c0_i32 = arith.constant 0 : i32
    %c0_i32_0 = arith.constant 0 : i32
    return %c0_i32, %arg1 : i32, i32
  }
  func.func @transform_3(%arg0: i32, %arg1: i32, %arg2: i32) -> (i32, i32) {
    %c0_i32 = arith.constant 0 : i32
    return %arg0, %arg1 : i32, i32
  }
}

module attributes {stable_mosaic.version = 11 : i64} {
  func.func @_matmul_bias_act_kernel(%arg0: i32, %arg1: i32, %arg2: i32, %arg3: memref<32x128xbf16, #tpu.memory_space<vmem>>, %arg4: memref<128x128xbf16, #tpu.memory_space<vmem>>, %arg5: memref<1x128xf32, #tpu.memory_space<vmem>>, %arg6: memref<32x128xf32, #tpu.memory_space<vmem>>, %arg7: memref<32x128xf32, #tpu.memory_space<vmem>>) attributes {dimension_semantics = [#tpu.dimension_semantics<parallel>, #tpu.dimension_semantics<parallel>, #tpu.dimension_semantics<arbitrary>], iteration_bounds = array<i64: 1, 1, 1>, scalar_prefetch = 0 : i64, scratch_operands = 1 : i64, tpu.core_type = #tpu.core_type<tc>, window_params = [{transform_indices = @transform_0, window_bounds = array<i64: 32, 128>}, {transform_indices = @transform_1, window_bounds = array<i64: 128, 128>}, {transform_indices = @transform_2, window_bounds = array<i64: 1, 128>}, {transform_indices = @transform_3, window_bounds = array<i64: 32, 128>}]} {
    %c0_i32 = arith.constant 0 : i32
    %0 = arith.cmpi eq, %arg2, %c0_i32 : i32
    %1 = arith.extui %0 : i1 to i32
    %c0_i32_0 = arith.constant 0 : i32
    %2 = arith.cmpi ne, %1, %c0_i32_0 : i32
    scf.if %2 {
      %cst_10 = arith.constant 0.000000e+00 : f32
      %12 = vector.broadcast %cst_10 : f32 to vector<32x128xf32>
      %c0_11 = arith.constant 0 : index
      %c0_12 = arith.constant 0 : index
      %13 = vector.load %arg7[%c0_11, %c0_12] : memref<32x128xf32, #tpu.memory_space<vmem>>, vector<32x128xf32>
      tpu.vector_store %arg7[%c0_11, %c0_12], %12 {strides = array<i32>} : memref<32x128xf32, #tpu.memory_space<vmem>>, vector<32x128xf32>,
    } else {
    }
    %c0 = arith.constant 0 : index
    %c0_1 = arith.constant 0 : index
    %3 = vector.load %arg7[%c0, %c0_1] : memref<32x128xf32, #tpu.memory_space<vmem>>, vector<32x128xf32>
    %c0_2 = arith.constant 0 : index
    %c0_3 = arith.constant 0 : index
    %4 = vector.load %arg3[%c0_2, %c0_3] : memref<32x128xbf16, #tpu.memory_space<vmem>>, vector<32x128xbf16>
    %c0_4 = arith.constant 0 : index
    %c0_5 = arith.constant 0 : index
    %5 = vector.load %arg4[%c0_4, %c0_5] : memref<128x128xbf16, #tpu.memory_space<vmem>>, vector<128x128xbf16>
    %cst = arith.constant dense<0.000000e+00> : vector<32x128xf32>
    %6 = tpu.matmul %4, %5, %cst {dimension_numbers = #tpu.dot_dimension_numbers<[1], [0], [0], [1], [0, 0, 1, 1], [], []>} : vector<32x128xbf16>, vector<128x128xbf16>, vector<32x128xf32> -> vector<32x128xf32>
    %7 = arith.addf %3, %6 : vector<32x128xf32>
    %c0_6 = arith.constant 0 : index
    %c0_7 = arith.constant 0 : index
    %8 = vector.load %arg7[%c0_6, %c0_7] : memref<32x128xf32, #tpu.memory_space<vmem>>, vector<32x128xf32>
    tpu.vector_store %arg7[%c0_6, %c0_7], %7 {strides = array<i32>} : memref<32x128xf32, #tpu.memory_space<vmem>>, vector<32x128xf32>,
    %c0_i32_8 = arith.constant 0 : i32
    %9 = arith.cmpi eq, %arg2, %c0_i32_8 : i32
    %10 = arith.extui %9 : i1 to i32
    %c0_i32_9 = arith.constant 0 : i32
    %11 = arith.cmpi ne, %10, %c0_i32_9 : i32
    scf.if %11 {
      %c0_10 = arith.constant 0 : index
      %c0_11 = arith.constant 0 : index
      %12 = vector.load %arg7[%c0_10, %c0_11] : memref<32x128xf32, #tpu.memory_space<vmem>>, vector<32x128xf32>
      %c0_12 = arith.constant 0 : index
      %c0_13 = arith.constant 0 : index
      %13 = vector.load %arg5[%c0_12, %c0_13] : memref<1x128xf32, #tpu.memory_space<vmem>>, vector<1x128xf32>
      %14 = vector.broadcast %13 : vector<1x128xf32> to vector<32x128xf32>
      %15 = arith.addf %12, %14 : vector<32x128xf32>
      %c0_14 = arith.constant 0 : index
      %c0_15 = arith.constant 0 : index
      %16 = vector.load %arg6[%c0_14, %c0_15] : memref<32x128xf32, #tpu.memory_space<vmem>>, vector<32x128xf32>
      tpu.vector_store %arg6[%c0_14, %c0_15], %15 {strides = array<i32>} : memref<32x128xf32, #tpu.memory_space<vmem>>, vector<32x128xf32>,
    } else {
    }
    return
  }
  func.func @transform_0(%arg0: i32, %arg1: i32, %arg2: i32) -> (i32, i32) {
    %c0_i32 = arith.constant 0 : i32
    return %arg0, %arg2 : i32, i32
  }
  func.func @transform_1(%arg0: i32, %arg1: i32, %arg2: i32) -> (i32, i32) {
    %c0_i32 = arith.constant 0 : i32
    return %arg2, %arg1 : i32, i32
  }
  func.func @transform_2(%arg0: i32, %arg1: i32, %arg2: i32) -> (i32, i32) {
    %c0_i32 = arith.constant 0 : i32
    %c0_i32_0 = arith.constant 0 : i32
    return %c0_i32, %arg1 : i32, i32
  }
  func.func @transform_3(%arg0: i32, %arg1: i32, %arg2: i32) -> (i32, i32) {
    %c0_i32 = arith.constant 0 : i32
    return %arg0, %arg1 : i32, i32
  }
}

module attributes {stable_mosaic.version = 11 : i64} {
  func.func @_matmul_bias_act_kernel(%arg0: i32, %arg1: i32, %arg2: i32, %arg3: memref<32x256xbf16, #tpu.memory_space<vmem>>, %arg4: memref<256x128xbf16, #tpu.memory_space<vmem>>, %arg5: memref<1x128xf32, #tpu.memory_space<vmem>>, %arg6: memref<32x128xbf16, #tpu.memory_space<vmem>>, %arg7: memref<32x128xf32, #tpu.memory_space<vmem>>) attributes {dimension_semantics = [#tpu.dimension_semantics<parallel>, #tpu.dimension_semantics<parallel>, #tpu.dimension_semantics<arbitrary>], iteration_bounds = array<i64: 1, 1, 1>, scalar_prefetch = 0 : i64, scratch_operands = 1 : i64, tpu.core_type = #tpu.core_type<tc>, window_params = [{transform_indices = @transform_0, window_bounds = array<i64: 32, 256>}, {transform_indices = @transform_1, window_bounds = array<i64: 256, 128>}, {transform_indices = @transform_2, window_bounds = array<i64: 1, 128>}, {transform_indices = @transform_3, window_bounds = array<i64: 32, 128>}]} {
    %c0_i32 = arith.constant 0 : i32
    %0 = arith.cmpi eq, %arg2, %c0_i32 : i32
    %1 = arith.extui %0 : i1 to i32
    %c0_i32_0 = arith.constant 0 : i32
    %2 = arith.cmpi ne, %1, %c0_i32_0 : i32
    scf.if %2 {
      %cst_10 = arith.constant 0.000000e+00 : f32
      %12 = vector.broadcast %cst_10 : f32 to vector<32x128xf32>
      %c0_11 = arith.constant 0 : index
      %c0_12 = arith.constant 0 : index
      %13 = vector.load %arg7[%c0_11, %c0_12] : memref<32x128xf32, #tpu.memory_space<vmem>>, vector<32x128xf32>
      tpu.vector_store %arg7[%c0_11, %c0_12], %12 {strides = array<i32>} : memref<32x128xf32, #tpu.memory_space<vmem>>, vector<32x128xf32>,
    } else {
    }
    %c0 = arith.constant 0 : index
    %c0_1 = arith.constant 0 : index
    %3 = vector.load %arg7[%c0, %c0_1] : memref<32x128xf32, #tpu.memory_space<vmem>>, vector<32x128xf32>
    %c0_2 = arith.constant 0 : index
    %c0_3 = arith.constant 0 : index
    %4 = vector.load %arg3[%c0_2, %c0_3] : memref<32x256xbf16, #tpu.memory_space<vmem>>, vector<32x256xbf16>
    %c0_4 = arith.constant 0 : index
    %c0_5 = arith.constant 0 : index
    %5 = vector.load %arg4[%c0_4, %c0_5] : memref<256x128xbf16, #tpu.memory_space<vmem>>, vector<256x128xbf16>
    %cst = arith.constant dense<0.000000e+00> : vector<32x128xf32>
    %6 = tpu.matmul %4, %5, %cst {dimension_numbers = #tpu.dot_dimension_numbers<[1], [0], [0], [1], [0, 0, 1, 1], [], []>} : vector<32x256xbf16>, vector<256x128xbf16>, vector<32x128xf32> -> vector<32x128xf32>
    %7 = arith.addf %3, %6 : vector<32x128xf32>
    %c0_6 = arith.constant 0 : index
    %c0_7 = arith.constant 0 : index
    %8 = vector.load %arg7[%c0_6, %c0_7] : memref<32x128xf32, #tpu.memory_space<vmem>>, vector<32x128xf32>
    tpu.vector_store %arg7[%c0_6, %c0_7], %7 {strides = array<i32>} : memref<32x128xf32, #tpu.memory_space<vmem>>, vector<32x128xf32>,
    %c0_i32_8 = arith.constant 0 : i32
    %9 = arith.cmpi eq, %arg2, %c0_i32_8 : i32
    %10 = arith.extui %9 : i1 to i32
    %c0_i32_9 = arith.constant 0 : i32
    %11 = arith.cmpi ne, %10, %c0_i32_9 : i32
    scf.if %11 {
      %c0_10 = arith.constant 0 : index
      %c0_11 = arith.constant 0 : index
      %12 = vector.load %arg7[%c0_10, %c0_11] : memref<32x128xf32, #tpu.memory_space<vmem>>, vector<32x128xf32>
      %c0_12 = arith.constant 0 : index
      %c0_13 = arith.constant 0 : index
      %13 = vector.load %arg5[%c0_12, %c0_13] : memref<1x128xf32, #tpu.memory_space<vmem>>, vector<1x128xf32>
      %14 = vector.broadcast %13 : vector<1x128xf32> to vector<32x128xf32>
      %15 = arith.addf %12, %14 : vector<32x128xf32>
      %16 = arith.negf %15 : vector<32x128xf32>
      %17 = math.exp %16 : vector<32x128xf32>
      %cst_14 = arith.constant 1.000000e+00 : f32
      %18 = vector.broadcast %cst_14 : f32 to vector<32x128xf32>
      %19 = arith.addf %18, %17 : vector<32x128xf32>
      %20 = arith.divf %18, %19 : vector<32x128xf32>
      %21 = arith.mulf %15, %20 : vector<32x128xf32>
      %22 = arith.truncf %21 : vector<32x128xf32> to vector<32x128xbf16>
      %c0_15 = arith.constant 0 : index
      %c0_16 = arith.constant 0 : index
      %23 = vector.load %arg6[%c0_15, %c0_16] : memref<32x128xbf16, #tpu.memory_space<vmem>>, vector<32x128xbf16>
      tpu.vector_store %arg6[%c0_15, %c0_16], %22 {strides = array<i32>} : memref<32x128xbf16, #tpu.memory_space<vmem>>, vector<32x128xbf16>,
    } else {
    }
    return
  }
  func.func @transform_0(%arg0: i32, %arg1: i32, %arg2: i32) -> (i32, i32) {
    %c0_i32 = arith.constant 0 : i32
    return %arg0, %arg2 : i32, i32
  }
  func.func @transform_1(%arg0: i32, %arg1: i32, %arg2: i32) -> (i32, i32) {
    %c0_i32 = arith.constant 0 : i32
    return %arg2, %arg1 : i32, i32
  }
  func.func @transform_2(%arg0: i32, %arg1: i32, %arg2: i32) -> (i32, i32) {
    %c0_i32 = arith.constant 0 : i32
    %c0_i32_0 = arith.constant 0 : i32
    return %c0_i32, %arg1 : i32, i32
  }
  func.func @transform_3(%arg0: i32, %arg1: i32, %arg2: i32) -> (i32, i32) {
    %c0_i32 = arith.constant 0 : i32
    return %arg0, %arg1 : i32, i32
  }
}

</mosaic_0001>

<llo_original>
// kernel: forward.3
$region0: #{forward.3}
  #allocation0 [shape = 'u32[]', space=smem, size = 0x4, offset = 0x4, fixed_abs, tag = 'smem constant byte address 0x4 - core index']
  #allocation1 [shape = 'u32[144,128]{1,0:T(1,128)}', space=vmem, size = 0x12000, scoped, tag = 'internal scratch']
  #allocation2 [shape = 'f32[128,128]{1,0:T(8,128)}', space=vmem, size = 0x10000, scoped, tag = 'scratch operand']
  %s0 = inlined_call_operand.vmem [shape: bf16[128,128], index: 0, kind: input, shape index: {}]
  %s1 = inlined_call_operand.vmem [shape: bf16[128,128], index: 1, kind: input, shape index: {}]
  %s2 = inlined_call_operand.vmem [shape: f32[1,128], index: 2, kind: input, shape index: {}]
  %s3 = inlined_call_operand.vmem [shape: bf16[128,128], index: 3, kind: output, shape index: {}]
  %s4 = sld [smem:[#allocation0]]
  $region30: #{forward.3} parent=0
    _
  %s6 = ssub.s32 1, %s4
  %s7 = scalar_select 0, %s6, %s4
  // Predicated region
  $region2: #{forward.3} parent=0 // pred_check
    _
  $region3: #{forward.3} parent=0 // pred_check_branch
    %9 = sbr.rel (0) target = $region5
  $region4: #{forward.3} parent=0 // pred_region
    _
  $region5: #{forward.3} parent=0 // pred_fallthru
    _
  // Predicated region
  $region6: #{forward.3} parent=0 // pred_check
    _
  $region7: #{forward.3} parent=0 // pred_check_branch
    %11 = sbr.rel (0) target = $region9
  $region8: #{forward.3} parent=0 // pred_region
    _
  $region9: #{forward.3} parent=0 // pred_fallthru
    _
  // Predicated region
  $region10: #{forward.3} parent=0 // pred_check
    _
  $region11: #{forward.3} parent=0 // pred_check_branch
    %13 = sbr.rel (0) target = $region13
  $region12: #{forward.3} parent=0 // pred_region
    _
  $region13: #{forward.3} parent=0 // pred_fallthru
    _
  %p15 = scmp.eq.s32.totalorder 0, 0
  // Predicated region
  $region14: #{forward.3} parent=0 // pred_check
    %p16 = pneg %p15
  $region15: #{forward.3} parent=0 // pred_check_branch
    %18 = sbr.rel (%p16) target = $region17
  $region16: #{forward.3} parent=0 // pred_region
    %19 = vst [vmem:[#allocation2] sm:$0xff] 0.0
    %20 = vst [vmem:[#allocation2 + $0x8] sm:$0xff] 0.0
    %21 = vst [vmem:[#allocation2 + $0x10] sm:$0xff] 0.0
    %22 = vst [vmem:[#allocation2 + $0x18] sm:$0xff] 0.0
    %23 = vst [vmem:[#allocation2 + $0x20] sm:$0xff] 0.0
    %24 = vst [vmem:[#allocation2 + $0x28] sm:$0xff] 0.0
    %25 = vst [vmem:[#allocation2 + $0x30] sm:$0xff] 0.0
    %26 = vst [vmem:[#allocation2 + $0x38] sm:$0xff] 0.0
    %27 = vst [vmem:[#allocation2 + $0x40] sm:$0xff] 0.0
    %28 = vst [vmem:[#allocation2 + $0x48] sm:$0xff] 0.0
    %29 = vst [vmem:[#allocation2 + $0x50] sm:$0xff] 0.0
    %30 = vst [vmem:[#allocation2 + $0x58] sm:$0xff] 0.0
    %31 = vst [vmem:[#allocation2 + $0x60] sm:$0xff] 0.0
    %32 = vst [vmem:[#allocation2 + $0x68] sm:$0xff] 0.0
    %33 = vst [vmem:[#allocation2 + $0x70] sm:$0xff] 0.0
    %34 = vst [vmem:[#allocation2 + $0x78] sm:$0xff] 0.0
  $region17: #{forward.3} parent=0 // pred_fallthru
    _
  %v35 = vld [vmem:[#allocation2] sm:$0xff]
  %v36 = vld [vmem:[#allocation2 + $0x8] sm:$0xff]
  %v37 = vld [vmem:[#allocation2 + $0x10] sm:$0xff]
  %v38 = vld [vmem:[#allocation2 + $0x18] sm:$0xff]
  %v39 = vld [vmem:[#allocation2 + $0x20] sm:$0xff]
  %v40 = vld [vmem:[#allocation2 + $0x28] sm:$0xff]
  %v41 = vld [vmem:[#allocation2 + $0x30] sm:$0xff]
  %v42 = vld [vmem:[#allocation2 + $0x38] sm:$0xff]
  %v43 = vld [vmem:[#allocation2 + $0x40] sm:$0xff]
  %v44 = vld [vmem:[#allocation2 + $0x48] sm:$0xff]
  %v45 = vld [vmem:[#allocation2 + $0x50] sm:$0xff]
  %v46 = vld [vmem:[#allocation2 + $0x58] sm:$0xff]
  %v47 = vld [vmem:[#allocation2 + $0x60] sm:$0xff]
  %v48 = vld [vmem:[#allocation2 + $0x68] sm:$0xff]
  %v49 = vld [vmem:[#allocation2 + $0x70] sm:$0xff]
  %v50 = vld [vmem:[#allocation2 + $0x78] sm:$0xff]
  %v51 = vld [vmem:[%s0] sm:$0xf]
  %v52 = vld [vmem:[%s0 + $0x4] sm:$0xf]
  %v53 = vld [vmem:[%s0 + $0x8] sm:$0xf]
  %v54 = vld [vmem:[%s0 + $0xc] sm:$0xf]
  %v55 = vld [vmem:[%s0 + $0x10] sm:$0xf]
  %v56 = vld [vmem:[%s0 + $0x14] sm:$0xf]
  %v57 = vld [vmem:[%s0 + $0x18] sm:$0xf]
  %v58 = vld [vmem:[%s0 + $0x1c] sm:$0xf]
  %v59 = vld [vmem:[%s0 + $0x20] sm:$0xf]
  %v60 = vld [vmem:[%s0 + $0x24] sm:$0xf]
  %v61 = vld [vmem:[%s0 + $0x28] sm:$0xf]
  %v62 = vld [vmem:[%s0 + $0x2c] sm:$0xf]
  %v63 = vld [vmem:[%s0 + $0x30] sm:$0xf]
  %v64 = vld [vmem:[%s0 + $0x34] sm:$0xf]
  %v65 = vld [vmem:[%s0 + $0x38] sm:$0xf]
  %v66 = vld [vmem:[%s0 + $0x3c] sm:$0xf]
  %v67 = vld [vmem:[%s1] sm:$0xf]
  %v68 = vld [vmem:[%s1 + $0x4] sm:$0xf]
  %v69 = vld [vmem:[%s1 + $0x8] sm:$0xf]
  %v70 = vld [vmem:[%s1 + $0xc] sm:$0xf]
  %v71 = vld [vmem:[%s1 + $0x10] sm:$0xf]
  %v72 = vld [vmem:[%s1 + $0x14] sm:$0xf]
  %v73 = vld [vmem:[%s1 + $0x18] sm:$0xf]
  %v74 = vld [vmem:[%s1 + $0x1c] sm:$0xf]
  %v75 = vld [vmem:[%s1 + $0x20] sm:$0xf]
  %v76 = vld [vmem:[%s1 + $0x24] sm:$0xf]
  %v77 = vld [vmem:[%s1 + $0x28] sm:$0xf]
  %v78 = vld [vmem:[%s1 + $0x2c] sm:$0xf]
  %v79 = vld [vmem:[%s1 + $0x30] sm:$0xf]
  %v80 = vld [vmem:[%s1 + $0x34] sm:$0xf]
  %v81 = vld [vmem:[%s1 + $0x38] sm:$0xf]
  %v82 = vld [vmem:[%s1 + $0x3c] sm:$0xf]
  %v99 = vunpack.c.l.b16 %v51
  %v100 = vunpack.c.l.b16 %v52
  %v101 = vunpack.c.l.b16 %v53
  %v102 = vunpack.c.l.b16 %v54
  %v103 = vunpack.c.l.b16 %v55
  %v104 = vunpack.c.l.b16 %v56
  %v105 = vunpack.c.l.b16 %v57
  %v106 = vunpack.c.l.b16 %v58
  %v107 = vunpack.c.l.b16 %v59
  %v108 = vunpack.c.l.b16 %v60
  %v109 = vunpack.c.l.b16 %v61
  %v110 = vunpack.c.l.b16 %v62
  %v111 = vunpack.c.l.b16 %v63
  %v112 = vunpack.c.l.b16 %v64
  %v113 = vunpack.c.l.b16 %v65
  %v114 = vunpack.c.l.b16 %v66
  %v115 = vpack.c.b16 %v100, %v99
  %v116 = vpack.c.b16 %v102, %v101
  %v117 = vpack.c.b16 %v104, %v103
  %v118 = vpack.c.b16 %v106, %v105
  %v119 = vpack.c.b16 %v108, %v107
  %v120 = vpack.c.b16 %v110, %v109
  %v121 = vpack.c.b16 %v112, %v111
  %v122 = vpack.c.b16 %v114, %v113
  %v147 = vunpack.c.l.b16 %v67
  %v148 = vunpack.c.l.b16 %v68
  %v149 = vunpack.c.l.b16 %v69
  %v150 = vunpack.c.l.b16 %v70
  %v151 = vunpack.c.l.b16 %v71
  %v152 = vunpack.c.l.b16 %v72
  %v153 = vunpack.c.l.b16 %v73
  %v154 = vunpack.c.l.b16 %v74
  %v155 = vunpack.c.l.b16 %v75
  %v156 = vunpack.c.l.b16 %v76
  %v157 = vunpack.c.l.b16 %v77
  %v158 = vunpack.c.l.b16 %v78
  %v159 = vunpack.c.l.b16 %v79
  %v160 = vunpack.c.l.b16 %v80
  %v161 = vunpack.c.l.b16 %v81
  %v162 = vunpack.c.l.b16 %v82
  %v163 = vpack.c.b16 %v148, %v147
  %v164 = vpack.c.b16 %v150, %v149
  %v165 = vpack.c.b16 %v152, %v151
  %v166 = vpack.c.b16 %v154, %v153
  %v167 = vpack.c.b16 %v156, %v155
  %v168 = vpack.c.b16 %v158, %v157
  %v169 = vpack.c.b16 %v160, %v159
  %v170 = vpack.c.b16 %v162, %v161
  %179 = vmatprep.subr.bf16.mxu0 0
  %180 = vmatpush1.bf16.msra.mxu0 %v170
  %181 = vmatprep.subr.bf16.mxu0 0
  %182 = vmatpush1.bf16.msra.mxu0 %v169
  %183 = vmatprep.subr.bf16.mxu0 0
  %184 = vmatpush1.bf16.msra.mxu0 %v168
  %185 = vmatprep.subr.bf16.mxu0 0
  %186 = vmatpush1.bf16.msra.mxu0 %v167
  %187 = vmatprep.subr.bf16.mxu0 0
  %188 = vmatpush1.bf16.msra.mxu0 %v166
  %189 = vmatprep.subr.bf16.mxu0 0
  %190 = vmatpush1.bf16.msra.mxu0 %v165
  %191 = vmatprep.subr.bf16.mxu0 0
  %192 = vmatpush1.bf16.msra.mxu0 %v164
  %193 = vmatprep.subr.bf16.mxu0 0
  %194 = vmatpush1.bf16.msra.mxu0 %v163
  %195 = vmatprep.subr.bf16.mxu0 0
  %196 = vmatpush2.bf16.msra.mxu0 0
  %197 = vmatprep.subr.bf16.mxu0 0
  %198 = vmatpush2.bf16.msra.mxu0 0
  %199 = vmatprep.subr.bf16.mxu0 0
  %200 = vmatpush2.bf16.msra.mxu0 0
  %201 = vmatprep.subr.bf16.mxu0 0
  %202 = vmatpush2.bf16.msra.mxu0 0
  %203 = vmatprep.subr.bf16.mxu0 0
  %204 = vmatpush2.bf16.msra.mxu0 0
  %205 = vmatprep.subr.bf16.mxu0 0
  %206 = vmatpush2.bf16.msra.mxu0 0
  %207 = vmatprep.subr.bf16.mxu0 0
  %208 = vmatpush2.bf16.msra.mxu0 0
  %209 = vmatprep.subr.bf16.mxu0 0
  %210 = vmatpush2.bf16.msra.mxu0 0
  %211 = vmatprep.mubr.bf16.mxu0 0
  %212 = vmatmul.mubr.bf16.gmra.mxu0 %v115
  %v213 = vpop.f32.mrf.mxu0
  %v214 = vadd.f32 0.0, %v213
  %v215 = vpop.f32.mrf.mxu0
  %v216 = vpop.f32.mrf.mxu0
  %v217 = vadd.f32 0.0, %v216
  %v218 = vpop.f32.mrf.mxu0
  %219 = vmatprep.mubr.bf16.mxu0 0
  %220 = vmatmul.mubr.bf16.gmra.mxu0 %v116
  %v221 = vpop.f32.mrf.mxu0
  %v222 = vadd.f32 0.0, %v221
  %v223 = vpop.f32.mrf.mxu0
  %v224 = vpop.f32.mrf.mxu0
  %v225 = vadd.f32 0.0, %v224
  %v226 = vpop.f32.mrf.mxu0
  %227 = vmatprep.mubr.bf16.mxu0 0
  %228 = vmatmul.mubr.bf16.gmra.mxu0 %v117
  %v229 = vpop.f32.mrf.mxu0
  %v230 = vadd.f32 0.0, %v229
  %v231 = vpop.f32.mrf.mxu0
  %v232 = vpop.f32.mrf.mxu0
  %v233 = vadd.f32 0.0, %v232
  %v234 = vpop.f32.mrf.mxu0
  %235 = vmatprep.mubr.bf16.mxu0 0
  %236 = vmatmul.mubr.bf16.gmra.mxu0 %v118
  %v237 = vpop.f32.mrf.mxu0
  %v238 = vadd.f32 0.0, %v237
  %v239 = vpop.f32.mrf.mxu0
  %v240 = vpop.f32.mrf.mxu0
  %v241 = vadd.f32 0.0, %v240
  %v242 = vpop.f32.mrf.mxu0
  %243 = vmatprep.mubr.bf16.mxu0 0
  %244 = vmatmul.mubr.bf16.gmra.mxu0 %v119
  %v245 = vpop.f32.mrf.mxu0
  %v246 = vadd.f32 0.0, %v245
  %v247 = vpop.f32.mrf.mxu0
  %v248 = vpop.f32.mrf.mxu0
  %v249 = vadd.f32 0.0, %v248
  %v250 = vpop.f32.mrf.mxu0
  %251 = vmatprep.mubr.bf16.mxu0 0
  %252 = vmatmul.mubr.bf16.gmra.mxu0 %v120
  %v253 = vpop.f32.mrf.mxu0
  %v254 = vadd.f32 0.0, %v253
  %v255 = vpop.f32.mrf.mxu0
  %v256 = vpop.f32.mrf.mxu0
  %v257 = vadd.f32 0.0, %v256
  %v258 = vpop.f32.mrf.mxu0
  %259 = vmatprep.mubr.bf16.mxu0 0
  %260 = vmatmul.mubr.bf16.gmra.mxu0 %v121
  %v261 = vpop.f32.mrf.mxu0
  %v262 = vadd.f32 0.0, %v261
  %v263 = vpop.f32.mrf.mxu0
  %v264 = vpop.f32.mrf.mxu0
  %v265 = vadd.f32 0.0, %v264
  %v266 = vpop.f32.mrf.mxu0
  %267 = vmatprep.mubr.bf16.mxu0 0
  %268 = vmatmul.mubr.bf16.gmra.mxu0 %v122
  %v269 = vpop.f32.mrf.mxu0
  %v270 = vadd.f32 0.0, %v269
  %v271 = vpop.f32.mrf.mxu0
  %v272 = vpop.f32.mrf.mxu0
  %v273 = vadd.f32 0.0, %v272
  %v274 = vpop.f32.mrf.mxu0
  %275 = vdwg.mxu0
  %v276 = vadd.f32 %v35, %v214
  %v277 = vadd.f32 %v36, %v217
  %v278 = vadd.f32 %v37, %v222
  %v279 = vadd.f32 %v38, %v225
  %v280 = vadd.f32 %v39, %v230
  %v281 = vadd.f32 %v40, %v233
  %v282 = vadd.f32 %v41, %v238
  %v283 = vadd.f32 %v42, %v241
  %v284 = vadd.f32 %v43, %v246
  %v285 = vadd.f32 %v44, %v249
  %v286 = vadd.f32 %v45, %v254
  %v287 = vadd.f32 %v46, %v257
  %v288 = vadd.f32 %v47, %v262
  %v289 = vadd.f32 %v48, %v265
  %v290 = vadd.f32 %v49, %v270
  %v291 = vadd.f32 %v50, %v273
  %292 = vst [vmem:[#allocation2] sm:$0xff] %v276
  %293 = vst [vmem:[#allocation2 + $0x8] sm:$0xff] %v277
  %294 = vst [vmem:[#allocation2 + $0x10] sm:$0xff] %v278
  %295 = vst [vmem:[#allocation2 + $0x18] sm:$0xff] %v279
  %296 = vst [vmem:[#allocation2 + $0x20] sm:$0xff] %v280
  %297 = vst [vmem:[#allocation2 + $0x28] sm:$0xff] %v281
  %298 = vst [vmem:[#allocation2 + $0x30] sm:$0xff] %v282
  %299 = vst [vmem:[#allocation2 + $0x38] sm:$0xff] %v283
  %300 = vst [vmem:[#allocation2 + $0x40] sm:$0xff] %v284
  %301 = vst [vmem:[#allocation2 + $0x48] sm:$0xff] %v285
  %302 = vst [vmem:[#allocation2 + $0x50] sm:$0xff] %v286
  %303 = vst [vmem:[#allocation2 + $0x58] sm:$0xff] %v287
  %304 = vst [vmem:[#allocation2 + $0x60] sm:$0xff] %v288
  %305 = vst [vmem:[#allocation2 + $0x68] sm:$0xff] %v289
  %306 = vst [vmem:[#allocation2 + $0x70] sm:$0xff] %v290
  %307 = vst [vmem:[#allocation2 + $0x78] sm:$0xff] %v291
  // Predicated region
  $region18: #{forward.3} parent=0 // pred_check
    %p308 = pneg %p15
  $region19: #{forward.3} parent=0 // pred_check_branch
    %310 = sbr.rel (%p308) target = $region21
  $region20: #{forward.3} parent=0 // pred_region
    %v311 = vld [vmem:[#allocation2] sm:$0xff]
    %v312 = vld [vmem:[#allocation2 + $0x8] sm:$0xff]
    %v313 = vld [vmem:[#allocation2 + $0x10] sm:$0xff]
    %v314 = vld [vmem:[#allocation2 + $0x18] sm:$0xff]
    %v315 = vld [vmem:[#allocation2 + $0x20] sm:$0xff]
    %v316 = vld [vmem:[#allocation2 + $0x28] sm:$0xff]
    %v317 = vld [vmem:[#allocation2 + $0x30] sm:$0xff]
    %v318 = vld [vmem:[#allocation2 + $0x38] sm:$0xff]
    %v319 = vld [vmem:[#allocation2 + $0x40] sm:$0xff]
    %v320 = vld [vmem:[#allocation2 + $0x48] sm:$0xff]
    %v321 = vld [vmem:[#allocation2 + $0x50] sm:$0xff]
    %v322 = vld [vmem:[#allocation2 + $0x58] sm:$0xff]
    %v323 = vld [vmem:[#allocation2 + $0x60] sm:$0xff]
    %v324 = vld [vmem:[#allocation2 + $0x68] sm:$0xff]
    %v325 = vld [vmem:[#allocation2 + $0x70] sm:$0xff]
    %v326 = vld [vmem:[#allocation2 + $0x78] sm:$0xff]
    %v327 = vld [vmem:[%s2] sm:$0x1]
    %v329 = vlaneseq
    %v330 = vshrl.u32 %v329, 7
    %v331 = vsub.s32 0, %v330
    %v332 = vrot.slane %v327, %v331
    %v334 = vadd.f32 %v311, %v332
    %v335 = vadd.f32 %v312, %v332
    %v336 = vadd.f32 %v313, %v332
    %v337 = vadd.f32 %v314, %v332
    %v338 = vadd.f32 %v315, %v332
    %v339 = vadd.f32 %v316, %v332
    %v340 = vadd.f32 %v317, %v332
    %v341 = vadd.f32 %v318, %v332
    %v342 = vadd.f32 %v319, %v332
    %v343 = vadd.f32 %v320, %v332
    %v344 = vadd.f32 %v321, %v332
    %v345 = vadd.f32 %v322, %v332
    %v346 = vadd.f32 %v323, %v332
    %v347 = vadd.f32 %v324, %v332
    %v348 = vadd.f32 %v325, %v332
    %v349 = vadd.f32 %v326, %v332
    %v350 = vxor.u32 %v334, 2147483648
    %v351 = vxor.u32 %v335, 2147483648
    %v352 = vxor.u32 %v336, 2147483648
    %v353 = vxor.u32 %v337, 2147483648
    %v354 = vxor.u32 %v338, 2147483648
    %v355 = vxor.u32 %v339, 2147483648
    %v356 = vxor.u32 %v340, 2147483648
    %v357 = vxor.u32 %v341, 2147483648
    %v358 = vxor.u32 %v342, 2147483648
    %v359 = vxor.u32 %v343, 2147483648
    %v360 = vxor.u32 %v344, 2147483648
    %v361 = vxor.u32 %v345, 2147483648
    %v362 = vxor.u32 %v346, 2147483648
    %v363 = vxor.u32 %v347, 2147483648
    %v364 = vxor.u32 %v348, 2147483648
    %v365 = vxor.u32 %v349, 2147483648
    %v366 = vmul.f32 %v350, 1.442695
    %v367 = vpow.pop %v366
    %v368 = vmul.f32 %v351, 1.442695
    %v369 = vpow.pop %v368
    %v370 = vmul.f32 %v352, 1.442695
    %v371 = vpow.pop %v370
    %v372 = vmul.f32 %v353, 1.442695
    %v373 = vpow.pop %v372
    %v374 = vmul.f32 %v354, 1.442695
    %v375 = vpow.pop %v374
    %v376 = vmul.f32 %v355, 1.442695
    %v377 = vpow.pop %v376
    %v378 = vmul.f32 %v356, 1.442695
    %v379 = vpow.pop %v378
    %v380 = vmul.f32 %v357, 1.442695
    %v381 = vpow.pop %v380
    %v382 = vmul.f32 %v358, 1.442695
    %v383 = vpow.pop %v382
    %v384 = vmul.f32 %v359, 1.442695
    %v385 = vpow.pop %v384
    %v386 = vmul.f32 %v360, 1.442695
    %v387 = vpow.pop %v386
    %v388 = vmul.f32 %v361, 1.442695
    %v389 = vpow.pop %v388
    %v390 = vmul.f32 %v362, 1.442695
    %v391 = vpow.pop %v390
    %v392 = vmul.f32 %v363, 1.442695
    %v393 = vpow.pop %v392
    %v394 = vmul.f32 %v364, 1.442695
    %v395 = vpow.pop %v394
    %v396 = vmul.f32 %v365, 1.442695
    %v397 = vpow.pop %v396
    %v398 = vadd.f32 %v367, 1.0
    %v399 = vadd.f32 %v369, 1.0
    %v400 = vadd.f32 %v371, 1.0
    %v401 = vadd.f32 %v373, 1.0
    %v402 = vadd.f32 %v375, 1.0
    %v403 = vadd.f32 %v377, 1.0
    %v404 = vadd.f32 %v379, 1.0
    %v405 = vadd.f32 %v381, 1.0
    %v406 = vadd.f32 %v383, 1.0
    %v407 = vadd.f32 %v385, 1.0
    %v408 = vadd.f32 %v387, 1.0
    %v409 = vadd.f32 %v389, 1.0
    %v410 = vadd.f32 %v391, 1.0
    %v411 = vadd.f32 %v393, 1.0
    %v412 = vadd.f32 %v395, 1.0
    %v413 = vadd.f32 %v397, 1.0
    %v414 = vrcp.pop %v398
    %v415 = vmul.f32 1.0, %v414
    %v416 = vrcp.pop %v399
    %v417 = vmul.f32 1.0, %v416
    %v418 = vrcp.pop %v400
    %v419 = vmul.f32 1.0, %v418
    %v420 = vrcp.pop %v401
    %v421 = vmul.f32 1.0, %v420
    %v422 = vrcp.pop %v402
    %v423 = vmul.f32 1.0, %v422
    %v424 = vrcp.pop %v403
    %v425 = vmul.f32 1.0, %v424
    %v426 = vrcp.pop %v404
    %v427 = vmul.f32 1.0, %v426
    %v428 = vrcp.pop %v405
    %v429 = vmul.f32 1.0, %v428
    %v430 = vrcp.pop %v406
    %v431 = vmul.f32 1.0, %v430
    %v432 = vrcp.pop %v407
    %v433 = vmul.f32 1.0, %v432
    %v434 = vrcp.pop %v408
    %v435 = vmul.f32 1.0, %v434
    %v436 = vrcp.pop %v409
    %v437 = vmul.f32 1.0, %v436
    %v438 = vrcp.pop %v410
    %v439 = vmul.f32 1.0, %v438
    %v440 = vrcp.pop %v411
    %v441 = vmul.f32 1.0, %v440
    %v442 = vrcp.pop %v412
    %v443 = vmul.f32 1.0, %v442
    %v444 = vrcp.pop %v413
    %v445 = vmul.f32 1.0, %v444
    %v446 = vmul.f32 %v334, %v415
    %v447 = vmul.f32 %v335, %v417
    %v448 = vmul.f32 %v336, %v419
    %v449 = vmul.f32 %v337, %v421
    %v450 = vmul.f32 %v338, %v423
    %v451 = vmul.f32 %v339, %v425
    %v452 = vmul.f32 %v340, %v427
    %v453 = vmul.f32 %v341, %v429
    %v454 = vmul.f32 %v342, %v431
    %v455 = vmul.f32 %v343, %v433
    %v456 = vmul.f32 %v344, %v435
    %v457 = vmul.f32 %v345, %v437
    %v458 = vmul.f32 %v346, %v439
    %v459 = vmul.f32 %v347, %v441
    %v460 = vmul.f32 %v348, %v443
    %v461 = vmul.f32 %v349, %v445
    %v462 = vpack.c.bf16 %v447, %v446
    %v463 = vpack.c.bf16 %v449, %v448
    %v464 = vpack.c.bf16 %v451, %v450
    %v465 = vpack.c.bf16 %v453, %v452
    %v466 = vpack.c.bf16 %v455, %v454
    %v467 = vpack.c.bf16 %v457, %v456
    %v468 = vpack.c.bf16 %v459, %v458
    %v469 = vpack.c.bf16 %v461, %v460
    %v478 = vunpack.c.l.b16 %v462
    %v479 = vunpack.c.h.b16 %v462
    %v480 = vunpack.c.l.b16 %v463
    %v481 = vunpack.c.h.b16 %v463
    %v482 = vunpack.c.l.b16 %v464
    %v483 = vunpack.c.h.b16 %v464
    %v484 = vunpack.c.l.b16 %v465
    %v485 = vunpack.c.h.b16 %v465
    %v486 = vunpack.c.l.b16 %v466
    %v487 = vunpack.c.h.b16 %v466
    %v488 = vunpack.c.l.b16 %v467
    %v489 = vunpack.c.h.b16 %v467
    %v490 = vunpack.c.l.b16 %v468
    %v491 = vunpack.c.h.b16 %v468
    %v492 = vunpack.c.l.b16 %v469
    %v493 = vunpack.c.h.b16 %v469
    %v494 = vpack.c.b16 %v478, %v478
    %v495 = vpack.c.b16 %v479, %v479
    %v496 = vpack.c.b16 %v480, %v480
    %v497 = vpack.c.b16 %v481, %v481
    %v498 = vpack.c.b16 %v482, %v482
    %v499 = vpack.c.b16 %v483, %v483
    %v500 = vpack.c.b16 %v484, %v484
    %v501 = vpack.c.b16 %v485, %v485
    %v502 = vpack.c.b16 %v486, %v486
    %v503 = vpack.c.b16 %v487, %v487
    %v504 = vpack.c.b16 %v488, %v488
    %v505 = vpack.c.b16 %v489, %v489
    %v506 = vpack.c.b16 %v490, %v490
    %v507 = vpack.c.b16 %v491, %v491
    %v508 = vpack.c.b16 %v492, %v492
    %v509 = vpack.c.b16 %v493, %v493
    %526 = vst [vmem:[%s3] sm:$0xf] %v494
    %527 = vst [vmem:[%s3 + $0x4] sm:$0xf] %v495
    %528 = vst [vmem:[%s3 + $0x8] sm:$0xf] %v496
    %529 = vst [vmem:[%s3 + $0xc] sm:$0xf] %v497
    %530 = vst [vmem:[%s3 + $0x10] sm:$0xf] %v498
    %531 = vst [vmem:[%s3 + $0x14] sm:$0xf] %v499
    %532 = vst [vmem:[%s3 + $0x18] sm:$0xf] %v500
    %533 = vst [vmem:[%s3 + $0x1c] sm:$0xf] %v501
    %534 = vst [vmem:[%s3 + $0x20] sm:$0xf] %v502
    %535 = vst [vmem:[%s3 + $0x24] sm:$0xf] %v503
    %536 = vst [vmem:[%s3 + $0x28] sm:$0xf] %v504
    %537 = vst [vmem:[%s3 + $0x2c] sm:$0xf] %v505
    %538 = vst [vmem:[%s3 + $0x30] sm:$0xf] %v506
    %539 = vst [vmem:[%s3 + $0x34] sm:$0xf] %v507
    %540 = vst [vmem:[%s3 + $0x38] sm:$0xf] %v508
    %541 = vst [vmem:[%s3 + $0x3c] sm:$0xf] %v509
  $region21: #{forward.3} parent=0 // pred_fallthru
    _
  // Predicated region
  $region22: #{forward.3} parent=0 // pred_check
    _
  $region23: #{forward.3} parent=0 // pred_check_branch
    %543 = sbr.rel (0) target = $region25
  $region24: #{forward.3} parent=0 // pred_region
    _
  $region25: #{forward.3} parent=0 // pred_fallthru
    _
  // Predicated region
  $region26: #{forward.3} parent=0 // pred_check
    _
  $region27: #{forward.3} parent=0 // pred_check_branch
    %545 = sbr.rel (0) target = $region29
  $region28: #{forward.3} parent=0 // pred_region
    _
  $region29: #{forward.3} parent=0 // pred_fallthru
    _

// kernel: forward.5
$region0: #{forward.5}
  #allocation0 [shape = 'u32[]', space=smem, size = 0x4, offset = 0x4, fixed_abs, tag = 'smem constant byte address 0x4 - core index']
  #allocation1 [shape = 'u32[144,128]{1,0:T(1,128)}', space=vmem, size = 0x12000, scoped, tag = 'internal scratch']
  #allocation2 [shape = 'f32[32,128]{1,0:T(8,128)}', space=vmem, size = 0x4000, scoped, tag = 'scratch operand']
  %s0 = inlined_call_operand.vmem [shape: bf16[32,128], index: 0, kind: input, shape index: {}]
  %s1 = inlined_call_operand.vmem [shape: bf16[128,128], index: 1, kind: input, shape index: {}]
  %s2 = inlined_call_operand.vmem [shape: f32[1,128], index: 2, kind: input, shape index: {}]
  %s3 = inlined_call_operand.vmem [shape: f32[32,128], index: 3, kind: output, shape index: {}]
  %s4 = sld [smem:[#allocation0]]
  $region30: #{forward.5} parent=0
    _
  %s6 = ssub.s32 1, %s4
  %s7 = scalar_select 0, %s6, %s4
  // Predicated region
  $region2: #{forward.5} parent=0 // pred_check
    _
  $region3: #{forward.5} parent=0 // pred_check_branch
    %9 = sbr.rel (0) target = $region5
  $region4: #{forward.5} parent=0 // pred_region
    _
  $region5: #{forward.5} parent=0 // pred_fallthru
    _
  // Predicated region
  $region6: #{forward.5} parent=0 // pred_check
    _
  $region7: #{forward.5} parent=0 // pred_check_branch
    %11 = sbr.rel (0) target = $region9
  $region8: #{forward.5} parent=0 // pred_region
    _
  $region9: #{forward.5} parent=0 // pred_fallthru
    _
  // Predicated region
  $region10: #{forward.5} parent=0 // pred_check
    _
  $region11: #{forward.5} parent=0 // pred_check_branch
    %13 = sbr.rel (0) target = $region13
  $region12: #{forward.5} parent=0 // pred_region
    _
  $region13: #{forward.5} parent=0 // pred_fallthru
    _
  %p15 = scmp.eq.s32.totalorder 0, 0
  // Predicated region
  $region14: #{forward.5} parent=0 // pred_check
    %p16 = pneg %p15
  $region15: #{forward.5} parent=0 // pred_check_branch
    %18 = sbr.rel (%p16) target = $region17
  $region16: #{forward.5} parent=0 // pred_region
    %19 = vst [vmem:[#allocation2] sm:$0xff] 0.0
    %20 = vst [vmem:[#allocation2 + $0x8] sm:$0xff] 0.0
    %21 = vst [vmem:[#allocation2 + $0x10] sm:$0xff] 0.0
    %22 = vst [vmem:[#allocation2 + $0x18] sm:$0xff] 0.0
  $region17: #{forward.5} parent=0 // pred_fallthru
    _
  %v23 = vld [vmem:[#allocation2] sm:$0xff]
  %v24 = vld [vmem:[#allocation2 + $0x8] sm:$0xff]
  %v25 = vld [vmem:[#allocation2 + $0x10] sm:$0xff]
  %v26 = vld [vmem:[#allocation2 + $0x18] sm:$0xff]
  %v27 = vld [vmem:[%s0] sm:$0xf]
  %v28 = vld [vmem:[%s0 + $0x4] sm:$0xf]
  %v29 = vld [vmem:[%s0 + $0x8] sm:$0xf]
  %v30 = vld [vmem:[%s0 + $0xc] sm:$0xf]
  %v31 = vld [vmem:[%s1] sm:$0xf]
  %v32 = vld [vmem:[%s1 + $0x4] sm:$0xf]
  %v33 = vld [vmem:[%s1 + $0x8] sm:$0xf]
  %v34 = vld [vmem:[%s1 + $0xc] sm:$0xf]
  %v35 = vld [vmem:[%s1 + $0x10] sm:$0xf]
  %v36 = vld [vmem:[%s1 + $0x14] sm:$0xf]
  %v37 = vld [vmem:[%s1 + $0x18] sm:$0xf]
  %v38 = vld [vmem:[%s1 + $0x1c] sm:$0xf]
  %v39 = vld [vmem:[%s1 + $0x20] sm:$0xf]
  %v40 = vld [vmem:[%s1 + $0x24] sm:$0xf]
  %v41 = vld [vmem:[%s1 + $0x28] sm:$0xf]
  %v42 = vld [vmem:[%s1 + $0x2c] sm:$0xf]
  %v43 = vld [vmem:[%s1 + $0x30] sm:$0xf]
  %v44 = vld [vmem:[%s1 + $0x34] sm:$0xf]
  %v45 = vld [vmem:[%s1 + $0x38] sm:$0xf]
  %v46 = vld [vmem:[%s1 + $0x3c] sm:$0xf]
  %v51 = vunpack.c.l.b16 %v27
  %v52 = vunpack.c.l.b16 %v28
  %v53 = vunpack.c.l.b16 %v29
  %v54 = vunpack.c.l.b16 %v30
  %v55 = vpack.c.b16 %v52, %v51
  %v56 = vpack.c.b16 %v54, %v53
  %v75 = vunpack.c.l.b16 %v31
  %v76 = vunpack.c.l.b16 %v32
  %v77 = vunpack.c.l.b16 %v33
  %v78 = vunpack.c.l.b16 %v34
  %v79 = vunpack.c.l.b16 %v35
  %v80 = vunpack.c.l.b16 %v36
  %v81 = vunpack.c.l.b16 %v37
  %v82 = vunpack.c.l.b16 %v38
  %v83 = vunpack.c.l.b16 %v39
  %v84 = vunpack.c.l.b16 %v40
  %v85 = vunpack.c.l.b16 %v41
  %v86 = vunpack.c.l.b16 %v42
  %v87 = vunpack.c.l.b16 %v43
  %v88 = vunpack.c.l.b16 %v44
  %v89 = vunpack.c.l.b16 %v45
  %v90 = vunpack.c.l.b16 %v46
  %v91 = vpack.c.b16 %v76, %v75
  %v92 = vpack.c.b16 %v78, %v77
  %v93 = vpack.c.b16 %v80, %v79
  %v94 = vpack.c.b16 %v82, %v81
  %v95 = vpack.c.b16 %v84, %v83
  %v96 = vpack.c.b16 %v86, %v85
  %v97 = vpack.c.b16 %v88, %v87
  %v98 = vpack.c.b16 %v90, %v89
  %107 = vmatprep.subr.bf16.mxu0 0
  %108 = vmatpush1.bf16.msra.mxu0 %v98
  %109 = vmatprep.subr.bf16.mxu0 0
  %110 = vmatpush1.bf16.msra.mxu0 %v97
  %111 = vmatprep.subr.bf16.mxu0 0
  %112 = vmatpush1.bf16.msra.mxu0 %v96
  %113 = vmatprep.subr.bf16.mxu0 0
  %114 = vmatpush1.bf16.msra.mxu0 %v95
  %115 = vmatprep.subr.bf16.mxu0 0
  %116 = vmatpush1.bf16.msra.mxu0 %v94
  %117 = vmatprep.subr.bf16.mxu0 0
  %118 = vmatpush1.bf16.msra.mxu0 %v93
  %119 = vmatprep.subr.bf16.mxu0 0
  %120 = vmatpush1.bf16.msra.mxu0 %v92
  %121 = vmatprep.subr.bf16.mxu0 0
  %122 = vmatpush1.bf16.msra.mxu0 %v91
  %123 = vmatprep.subr.bf16.mxu0 0
  %124 = vmatpush2.bf16.msra.mxu0 0
  %125 = vmatprep.subr.bf16.mxu0 0
  %126 = vmatpush2.bf16.msra.mxu0 0
  %127 = vmatprep.subr.bf16.mxu0 0
  %128 = vmatpush2.bf16.msra.mxu0 0
  %129 = vmatprep.subr.bf16.mxu0 0
  %130 = vmatpush2.bf16.msra.mxu0 0
  %131 = vmatprep.subr.bf16.mxu0 0
  %132 = vmatpush2.bf16.msra.mxu0 0
  %133 = vmatprep.subr.bf16.mxu0 0
  %134 = vmatpush2.bf16.msra.mxu0 0
  %135 = vmatprep.subr.bf16.mxu0 0
  %136 = vmatpush2.bf16.msra.mxu0 0
  %137 = vmatprep.subr.bf16.mxu0 0
  %138 = vmatpush2.bf16.msra.mxu0 0
  %139 = vmatprep.mubr.bf16.mxu0 0
  %140 = vmatmul.mubr.bf16.gmra.mxu0 %v55
  %v141 = vpop.f32.mrf.mxu0
  %v142 = vadd.f32 0.0, %v141
  %v143 = vpop.f32.mrf.mxu0
  %v144 = vpop.f32.mrf.mxu0
  %v145 = vadd.f32 0.0, %v144
  %v146 = vpop.f32.mrf.mxu0
  %147 = vmatprep.mubr.bf16.mxu0 0
  %148 = vmatmul.mubr.bf16.gmra.mxu0 %v56
  %v149 = vpop.f32.mrf.mxu0
  %v150 = vadd.f32 0.0, %v149
  %v151 = vpop.f32.mrf.mxu0
  %v152 = vpop.f32.mrf.mxu0
  %v153 = vadd.f32 0.0, %v152
  %v154 = vpop.f32.mrf.mxu0
  %155 = vdwg.mxu0
  %v156 = vadd.f32 %v23, %v142
  %v157 = vadd.f32 %v24, %v145
  %v158 = vadd.f32 %v25, %v150
  %v159 = vadd.f32 %v26, %v153
  %160 = vst [vmem:[#allocation2] sm:$0xff] %v156
  %161 = vst [vmem:[#allocation2 + $0x8] sm:$0xff] %v157
  %162 = vst [vmem:[#allocation2 + $0x10] sm:$0xff] %v158
  %163 = vst [vmem:[#allocation2 + $0x18] sm:$0xff] %v159
  // Predicated region
  $region18: #{forward.5} parent=0 // pred_check
    %p164 = pneg %p15
  $region19: #{forward.5} parent=0 // pred_check_branch
    %166 = sbr.rel (%p164) target = $region21
  $region20: #{forward.5} parent=0 // pred_region
    %v167 = vld [vmem:[#allocation2] sm:$0xff]
    %v168 = vld [vmem:[#allocation2 + $0x8] sm:$0xff]
    %v169 = vld [vmem:[#allocation2 + $0x10] sm:$0xff]
    %v170 = vld [vmem:[#allocation2 + $0x18] sm:$0xff]
    %v171 = vld [vmem:[%s2] sm:$0x1]
    %v173 = vlaneseq
    %v174 = vshrl.u32 %v173, 7
    %v175 = vsub.s32 0, %v174
    %v176 = vrot.slane %v171, %v175
    %v178 = vadd.f32 %v167, %v176
    %v179 = vadd.f32 %v168, %v176
    %v180 = vadd.f32 %v169, %v176
    %v181 = vadd.f32 %v170, %v176
    %182 = vst [vmem:[%s3] sm:$0xff] %v178
    %183 = vst [vmem:[%s3 + $0x8] sm:$0xff] %v179
    %184 = vst [vmem:[%s3 + $0x10] sm:$0xff] %v180
    %185 = vst [vmem:[%s3 + $0x18] sm:$0xff] %v181
  $region21: #{forward.5} parent=0 // pred_fallthru
    _
  // Predicated region
  $region22: #{forward.5} parent=0 // pred_check
    _
  $region23: #{forward.5} parent=0 // pred_check_branch
    %187 = sbr.rel (0) target = $region25
  $region24: #{forward.5} parent=0 // pred_region
    _
  $region25: #{forward.5} parent=0 // pred_fallthru
    _
  // Predicated region
  $region26: #{forward.5} parent=0 // pred_check
    _
  $region27: #{forward.5} parent=0 // pred_check_branch
    %189 = sbr.rel (0) target = $region29
  $region28: #{forward.5} parent=0 // pred_region
    _
  $region29: #{forward.5} parent=0 // pred_fallthru
    _

// kernel: forward.4
$region0: #{forward.4}
  #allocation0 [shape = 'u32[]', space=smem, size = 0x4, offset = 0x4, fixed_abs, tag = 'smem constant byte address 0x4 - core index']
  #allocation1 [shape = 'u32[144,128]{1,0:T(1,128)}', space=vmem, size = 0x12000, scoped, tag = 'internal scratch']
  #allocation2 [shape = 'f32[32,128]{1,0:T(8,128)}', space=vmem, size = 0x4000, scoped, tag = 'scratch operand']
  %s0 = inlined_call_operand.vmem [shape: bf16[32,256], index: 0, kind: input, shape index: {}]
  %s1 = inlined_call_operand.vmem [shape: bf16[256,128], index: 1, kind: input, shape index: {}]
  %s2 = inlined_call_operand.vmem [shape: f32[1,128], index: 2, kind: input, shape index: {}]
  %s3 = inlined_call_operand.vmem [shape: bf16[32,128], index: 3, kind: output, shape index: {}]
  %s4 = sld [smem:[#allocation0]]
  $region30: #{forward.4} parent=0
    _
  %s6 = ssub.s32 1, %s4
  %s7 = scalar_select 0, %s6, %s4
  // Predicated region
  $region2: #{forward.4} parent=0 // pred_check
    _
  $region3: #{forward.4} parent=0 // pred_check_branch
    %9 = sbr.rel (0) target = $region5
  $region4: #{forward.4} parent=0 // pred_region
    _
  $region5: #{forward.4} parent=0 // pred_fallthru
    _
  // Predicated region
  $region6: #{forward.4} parent=0 // pred_check
    _
  $region7: #{forward.4} parent=0 // pred_check_branch
    %11 = sbr.rel (0) target = $region9
  $region8: #{forward.4} parent=0 // pred_region
    _
  $region9: #{forward.4} parent=0 // pred_fallthru
    _
  // Predicated region
  $region10: #{forward.4} parent=0 // pred_check
    _
  $region11: #{forward.4} parent=0 // pred_check_branch
    %13 = sbr.rel (0) target = $region13
  $region12: #{forward.4} parent=0 // pred_region
    _
  $region13: #{forward.4} parent=0 // pred_fallthru
    _
  %p15 = scmp.eq.s32.totalorder 0, 0
  // Predicated region
  $region14: #{forward.4} parent=0 // pred_check
    %p16 = pneg %p15
  $region15: #{forward.4} parent=0 // pred_check_branch
    %18 = sbr.rel (%p16) target = $region17
  $region16: #{forward.4} parent=0 // pred_region
    %19 = vst [vmem:[#allocation2] sm:$0xff] 0.0
    %20 = vst [vmem:[#allocation2 + $0x8] sm:$0xff] 0.0
    %21 = vst [vmem:[#allocation2 + $0x10] sm:$0xff] 0.0
    %22 = vst [vmem:[#allocation2 + $0x18] sm:$0xff] 0.0
  $region17: #{forward.4} parent=0 // pred_fallthru
    _
  %v23 = vld [vmem:[#allocation2] sm:$0xff]
  %v24 = vld [vmem:[#allocation2 + $0x8] sm:$0xff]
  %v25 = vld [vmem:[#allocation2 + $0x10] sm:$0xff]
  %v26 = vld [vmem:[#allocation2 + $0x18] sm:$0xff]
  %v27 = vld [vmem:[%s0] sm:$0xff]
  %v28 = vld [vmem:[%s0 + $0x8] sm:$0xff]
  %v29 = vld [vmem:[%s0 + $0x10] sm:$0xff]
  %v30 = vld [vmem:[%s0 + $0x18] sm:$0xff]
  %v31 = vld [vmem:[%s1] sm:$0xf]
  %v32 = vld [vmem:[%s1 + $0x4] sm:$0xf]
  %v33 = vld [vmem:[%s1 + $0x8] sm:$0xf]
  %v34 = vld [vmem:[%s1 + $0xc] sm:$0xf]
  %v35 = vld [vmem:[%s1 + $0x10] sm:$0xf]
  %v36 = vld [vmem:[%s1 + $0x14] sm:$0xf]
  %v37 = vld [vmem:[%s1 + $0x18] sm:$0xf]
  %v38 = vld [vmem:[%s1 + $0x1c] sm:$0xf]
  %v39 = vld [vmem:[%s1 + $0x20] sm:$0xf]
  %v40 = vld [vmem:[%s1 + $0x24] sm:$0xf]
  %v41 = vld [vmem:[%s1 + $0x28] sm:$0xf]
  %v42 = vld [vmem:[%s1 + $0x2c] sm:$0xf]
  %v43 = vld [vmem:[%s1 + $0x30] sm:$0xf]
  %v44 = vld [vmem:[%s1 + $0x34] sm:$0xf]
  %v45 = vld [vmem:[%s1 + $0x38] sm:$0xf]
  %v46 = vld [vmem:[%s1 + $0x3c] sm:$0xf]
  %v47 = vld [vmem:[%s1 + $0x40] sm:$0xf]
  %v48 = vld [vmem:[%s1 + $0x44] sm:$0xf]
  %v49 = vld [vmem:[%s1 + $0x48] sm:$0xf]
  %v50 = vld [vmem:[%s1 + $0x4c] sm:$0xf]
  %v51 = vld [vmem:[%s1 + $0x50] sm:$0xf]
  %v52 = vld [vmem:[%s1 + $0x54] sm:$0xf]
  %v53 = vld [vmem:[%s1 + $0x58] sm:$0xf]
  %v54 = vld [vmem:[%s1 + $0x5c] sm:$0xf]
  %v55 = vld [vmem:[%s1 + $0x60] sm:$0xf]
  %v56 = vld [vmem:[%s1 + $0x64] sm:$0xf]
  %v57 = vld [vmem:[%s1 + $0x68] sm:$0xf]
  %v58 = vld [vmem:[%s1 + $0x6c] sm:$0xf]
  %v59 = vld [vmem:[%s1 + $0x70] sm:$0xf]
  %v60 = vld [vmem:[%s1 + $0x74] sm:$0xf]
  %v61 = vld [vmem:[%s1 + $0x78] sm:$0xf]
  %v62 = vld [vmem:[%s1 + $0x7c] sm:$0xf]
  %v67 = vunpack.c.l.b16 %v27
  %v68 = vunpack.c.h.b16 %v27
  %v69 = vunpack.c.l.b16 %v28
  %v70 = vunpack.c.h.b16 %v28
  %v71 = vunpack.c.l.b16 %v29
  %v72 = vunpack.c.h.b16 %v29
  %v73 = vunpack.c.l.b16 %v30
  %v74 = vunpack.c.h.b16 %v30
  %v75 = vpack.c.b16 %v69, %v67
  %v76 = vpack.c.b16 %v70, %v68
  %v77 = vpack.c.b16 %v73, %v71
  %v78 = vpack.c.b16 %v74, %v72
  %v115 = vunpack.c.l.b16 %v31
  %v116 = vunpack.c.l.b16 %v32
  %v117 = vunpack.c.l.b16 %v33
  %v118 = vunpack.c.l.b16 %v34
  %v119 = vunpack.c.l.b16 %v35
  %v120 = vunpack.c.l.b16 %v36
  %v121 = vunpack.c.l.b16 %v37
  %v122 = vunpack.c.l.b16 %v38
  %v123 = vunpack.c.l.b16 %v39
  %v124 = vunpack.c.l.b16 %v40
  %v125 = vunpack.c.l.b16 %v41
  %v126 = vunpack.c.l.b16 %v42
  %v127 = vunpack.c.l.b16 %v43
  %v128 = vunpack.c.l.b16 %v44
  %v129 = vunpack.c.l.b16 %v45
  %v130 = vunpack.c.l.b16 %v46
  %v131 = vunpack.c.l.b16 %v47
  %v132 = vunpack.c.l.b16 %v48
  %v133 = vunpack.c.l.b16 %v49
  %v134 = vunpack.c.l.b16 %v50
  %v135 = vunpack.c.l.b16 %v51
  %v136 = vunpack.c.l.b16 %v52
  %v137 = vunpack.c.l.b16 %v53
  %v138 = vunpack.c.l.b16 %v54
  %v139 = vunpack.c.l.b16 %v55
  %v140 = vunpack.c.l.b16 %v56
  %v141 = vunpack.c.l.b16 %v57
  %v142 = vunpack.c.l.b16 %v58
  %v143 = vunpack.c.l.b16 %v59
  %v144 = vunpack.c.l.b16 %v60
  %v145 = vunpack.c.l.b16 %v61
  %v146 = vunpack.c.l.b16 %v62
  %v147 = vpack.c.b16 %v116, %v115
  %v148 = vpack.c.b16 %v118, %v117
  %v149 = vpack.c.b16 %v120, %v119
  %v150 = vpack.c.b16 %v122, %v121
  %v151 = vpack.c.b16 %v124, %v123
  %v152 = vpack.c.b16 %v126, %v125
  %v153 = vpack.c.b16 %v128, %v127
  %v154 = vpack.c.b16 %v130, %v129
  %v155 = vpack.c.b16 %v132, %v131
  %v156 = vpack.c.b16 %v134, %v133
  %v157 = vpack.c.b16 %v136, %v135
  %v158 = vpack.c.b16 %v138, %v137
  %v159 = vpack.c.b16 %v140, %v139
  %v160 = vpack.c.b16 %v142, %v141
  %v161 = vpack.c.b16 %v144, %v143
  %v162 = vpack.c.b16 %v146, %v145
  %179 = vmatprep.subr.bf16.mxu0 0
  %180 = vmatpush1.bf16.msra.mxu0 %v154
  %181 = vmatprep.subr.bf16.mxu0 0
  %182 = vmatpush1.bf16.msra.mxu0 %v153
  %183 = vmatprep.subr.bf16.mxu0 0
  %184 = vmatpush1.bf16.msra.mxu0 %v152
  %185 = vmatprep.subr.bf16.mxu0 0
  %186 = vmatpush1.bf16.msra.mxu0 %v151
  %187 = vmatprep.subr.bf16.mxu0 0
  %188 = vmatpush1.bf16.msra.mxu0 %v150
  %189 = vmatprep.subr.bf16.mxu0 0
  %190 = vmatpush1.bf16.msra.mxu0 %v149
  %191 = vmatprep.subr.bf16.mxu0 0
  %192 = vmatpush1.bf16.msra.mxu0 %v148
  %193 = vmatprep.subr.bf16.mxu0 0
  %194 = vmatpush1.bf16.msra.mxu0 %v147
  %195 = vmatprep.subr.bf16.mxu0 0
  %196 = vmatpush2.bf16.msra.mxu0 %v162
  %197 = vmatprep.subr.bf16.mxu0 0
  %198 = vmatpush2.bf16.msra.mxu0 %v161
  %199 = vmatprep.subr.bf16.mxu0 0
  %200 = vmatpush2.bf16.msra.mxu0 %v160
  %201 = vmatprep.subr.bf16.mxu0 0
  %202 = vmatpush2.bf16.msra.mxu0 %v159
  %203 = vmatprep.subr.bf16.mxu0 0
  %204 = vmatpush2.bf16.msra.mxu0 %v158
  %205 = vmatprep.subr.bf16.mxu0 0
  %206 = vmatpush2.bf16.msra.mxu0 %v157
  %207 = vmatprep.subr.bf16.mxu0 0
  %208 = vmatpush2.bf16.msra.mxu0 %v156
  %209 = vmatprep.subr.bf16.mxu0 0
  %210 = vmatpush2.bf16.msra.mxu0 %v155
  %211 = vmatprep.mubr.bf16.mxu0 %v76
  %212 = vmatmul.mubr.bf16.gmra.mxu0 %v75
  %v213 = vpop.f32.mrf.mxu0
  %v214 = vadd.f32 0.0, %v213
  %v215 = vpop.f32.mrf.mxu0
  %v216 = vpop.f32.mrf.mxu0
  %v217 = vadd.f32 0.0, %v216
  %v218 = vpop.f32.mrf.mxu0
  %219 = vmatprep.mubr.bf16.mxu0 %v78
  %220 = vmatmul.mubr.bf16.gmra.mxu0 %v77
  %v221 = vpop.f32.mrf.mxu0
  %v222 = vadd.f32 0.0, %v221
  %v223 = vpop.f32.mrf.mxu0
  %v224 = vpop.f32.mrf.mxu0
  %v225 = vadd.f32 0.0, %v224
  %v226 = vpop.f32.mrf.mxu0
  %227 = vdwg.mxu0
  %v228 = vadd.f32 %v23, %v214
  %v229 = vadd.f32 %v24, %v217
  %v230 = vadd.f32 %v25, %v222
  %v231 = vadd.f32 %v26, %v225
  %232 = vst [vmem:[#allocation2] sm:$0xff] %v228
  %233 = vst [vmem:[#allocation2 + $0x8] sm:$0xff] %v229
  %234 = vst [vmem:[#allocation2 + $0x10] sm:$0xff] %v230
  %235 = vst [vmem:[#allocation2 + $0x18] sm:$0xff] %v231
  // Predicated region
  $region18: #{forward.4} parent=0 // pred_check
    %p236 = pneg %p15
  $region19: #{forward.4} parent=0 // pred_check_branch
    %238 = sbr.rel (%p236) target = $region21
  $region20: #{forward.4} parent=0 // pred_region
    %v239 = vld [vmem:[#allocation2] sm:$0xff]
    %v240 = vld [vmem:[#allocation2 + $0x8] sm:$0xff]
    %v241 = vld [vmem:[#allocation2 + $0x10] sm:$0xff]
    %v242 = vld [vmem:[#allocation2 + $0x18] sm:$0xff]
    %v243 = vld [vmem:[%s2] sm:$0x1]
    %v245 = vlaneseq
    %v246 = vshrl.u32 %v245, 7
    %v247 = vsub.s32 0, %v246
    %v248 = vrot.slane %v243, %v247
    %v250 = vadd.f32 %v239, %v248
    %v251 = vadd.f32 %v240, %v248
    %v252 = vadd.f32 %v241, %v248
    %v253 = vadd.f32 %v242, %v248
    %v254 = vxor.u32 %v250, 2147483648
    %v255 = vxor.u32 %v251, 2147483648
    %v256 = vxor.u32 %v252, 2147483648
    %v257 = vxor.u32 %v253, 2147483648
    %v258 = vmul.f32 %v254, 1.442695
    %v259 = vpow.pop %v258
    %v260 = vmul.f32 %v255, 1.442695
    %v261 = vpow.pop %v260
    %v262 = vmul.f32 %v256, 1.442695
    %v263 = vpow.pop %v262
    %v264 = vmul.f32 %v257, 1.442695
    %v265 = vpow.pop %v264
    %v266 = vadd.f32 %v259, 1.0
    %v267 = vadd.f32 %v261, 1.0
    %v268 = vadd.f32 %v263, 1.0
    %v269 = vadd.f32 %v265, 1.0
    %v270 = vrcp.pop %v266
    %v271 = vmul.f32 1.0, %v270
    %v272 = vrcp.pop %v267
    %v273 = vmul.f32 1.0, %v272
    %v274 = vrcp.pop %v268
    %v275 = vmul.f32 1.0, %v274
    %v276 = vrcp.pop %v269
    %v277 = vmul.f32 1.0, %v276
    %v278 = vmul.f32 %v250, %v271
    %v279 = vmul.f32 %v251, %v273
    %v280 = vmul.f32 %v252, %v275
    %v281 = vmul.f32 %v253, %v277
    %v282 = vpack.c.bf16 %v279, %v278
    %v283 = vpack.c.bf16 %v281, %v280
    %v286 = vunpack.c.l.b16 %v282
    %v287 = vunpack.c.h.b16 %v282
    %v288 = vunpack.c.l.b16 %v283
    %v289 = vunpack.c.h.b16 %v283
    %v290 = vpack.c.b16 %v286, %v286
    %v291 = vpack.c.b16 %v287, %v287
    %v292 = vpack.c.b16 %v288, %v288
    %v293 = vpack.c.b16 %v289, %v289
    %298 = vst [vmem:[%s3] sm:$0xf] %v290
    %299 = vst [vmem:[%s3 + $0x4] sm:$0xf] %v291
    %300 = vst [vmem:[%s3 + $0x8] sm:$0xf] %v292
    %301 = vst [vmem:[%s3 + $0xc] sm:$0xf] %v293
  $region21: #{forward.4} parent=0 // pred_fallthru
    _
  // Predicated region
  $region22: #{forward.4} parent=0 // pred_check
    _
  $region23: #{forward.4} parent=0 // pred_check_branch
    %303 = sbr.rel (0) target = $region25
  $region24: #{forward.4} parent=0 // pred_region
    _
  $region25: #{forward.4} parent=0 // pred_fallthru
    _
  // Predicated region
  $region26: #{forward.4} parent=0 // pred_check
    _
  $region27: #{forward.4} parent=0 // pred_check_branch
    %305 = sbr.rel (0) target = $region29
  $region28: #{forward.4} parent=0 // pred_region
    _
  $region29: #{forward.4} parent=0 // pred_fallthru
    _

</llo_original>
